<compile_context>
chip_gen: v5e
topology: v5e:2x2
jax: 0.10.0
libtpu: 0.0.40
codegen_flags: <defaults>
</compile_context>

<pallas_src>
import functools

import jax
import jax.numpy as jnp
import numpy as np
from jax import lax
from jax.experimental import pallas as pl
from jax.experimental.pallas import tpu as pltpu

# Block-sizing budget (~40 MiB of live block memory) and explicit scoped-VMEM
# limit (48 MiB).  Both fit under v7x's 64 MiB physical VMEM with headroom
# and are well under v5e/v6e's 128 MiB.
_VMEM_BLOCK_BUDGET = 40 * 1024 * 1024
_VMEM_LIMIT_BYTES = 48 * 1024 * 1024


def _layernorm2d_kernel(x_ref, wb_ref, o_ref, *, eps):
    """Fused LayerNorm2d for one (batch, spatial-tile) block.

    x_ref:  (C, T)  input block; T spatial positions on lanes, C on sublanes.
    wb_ref: (C, 2)  fused f32 [weight, bias].
    o_ref:  (C, T)  output block.
    """
    x = x_ref[...].astype(jnp.float32)                 # (C, T)
    mu = jnp.mean(x, axis=0, keepdims=True)            # (1, T) sublane reduce
    xc = x - mu
    # Centered (numerically stable) variance; matches the PyTorch reference.
    var = jnp.mean(xc * xc, axis=0, keepdims=True)     # (1, T)
    inv = lax.rsqrt(var + eps)                         # EUP slot
    wb = wb_ref[...]                                   # (C, 2) f32
    w = wb[:, 0:1]                                     # (C, 1)
    b = wb[:, 1:2]                                     # (C, 1)
    o_ref[...] = (xc * inv * w + b).astype(o_ref.dtype)


def _pick_spatial_tile(hw_padded, c, itemsize):
    """Largest multiple-of-128 divisor of hw_padded fitting the VMEM budget."""
    pack = max(32 // itemsize, 8)          # sublane packing: 8 f32, 16 bf16, 32 i8
    c_pad = -(-c // pack) * pack           # channel axis padded on sublanes
    # Live bytes per spatial lane:
    #   2 (in+out) x 2 (double-buffer) x c_pad x itemsize   pipelined blocks
    # + 4 x c_pad x 4                                        f32 temporaries
    per_lane = 4 * c_pad * itemsize + 4 * c_pad * 4
    cap = max(_VMEM_BLOCK_BUDGET // per_lane, 128)
    cap = (cap // 128) * 128
    n128 = hw_padded // 128
    best = 1
    for d in range(min(n128, cap // 128), 0, -1):
        if n128 % d == 0:
            best = d
            break
    return best * 128


def layer_norm_2d(x, weight, bias, eps=1e-6):
    """x: (B, C, H, W), weight/bias: (C,).  Returns (B, C, H, W)."""
    B, C, H, W = x.shape
    HW = H * W
    pad = (-HW) % 128                       # keep stores lane-dense (unmasked vst)
    HWp = HW + pad

    x2 = x.reshape(B, C, HW)
    if pad:
        x2 = jnp.pad(x2, ((0, 0), (0, 0), (0, pad)))
    wb = jnp.stack([weight, bias], axis=1).astype(jnp.float32)   # (C, 2)

    itemsize = jnp.dtype(x.dtype).itemsize
    tile = _pick_spatial_tile(HWp, C, itemsize)
    grid = (B, HWp // tile)                 # both axes parallel -> megacore sharding

    kernel = functools.partial(_layernorm2d_kernel, eps=eps)
    out = pl.pallas_call(
        kernel,
        out_shape=jax.ShapeDtypeStruct((B, C, HWp), x.dtype),
        grid=grid,
        in_specs=[
            pl.BlockSpec((None, C, tile), lambda b, i: (b, 0, i)),
            pl.BlockSpec((C, 2), lambda b, i: (0, 0)),
        ],
        out_specs=pl.BlockSpec((None, C, tile), lambda b, i: (b, 0, i)),
        compiler_params=pltpu.CompilerParams(
            dimension_semantics=("parallel", "parallel"),
            vmem_limit_bytes=_VMEM_LIMIT_BYTES,
        ),
    )(x2, wb)
    if pad:
        out = out[:, :, :HW]
    return out.reshape(B, C, H, W)


# ---------------- pure-JAX reference (matches the PyTorch forward) ----------
def layer_norm_2d_ref(x, weight, bias, eps=1e-6):
    mu = jnp.mean(x, axis=1, keepdims=True)
    var = jnp.mean((x - mu) ** 2, axis=1, keepdims=True)
    y = (x - mu) / jnp.sqrt(var + eps)
    C = x.shape[1]
    return weight.reshape(1, C, 1, 1) * y + bias.reshape(1, C, 1, 1)


# TODO(synk): only the forward pass is implemented; the custom backward in
# LayerNormFunction is autograd-only and not part of this kernel.

if __name__ == "__main__":
    eps = 1e-6
    key = jax.random.PRNGKey(0)
    kx, kw, kb, kx2 = jax.random.split(key, 4)

    # Case 1: small config, HW a multiple of 128 (B=2, C=4, 16x16).
    B, C, H, W = 2, 4, 16, 16
    x = jax.random.normal(kx, (B, C, H, W), jnp.float32)
    # Module initializes weight=ones, bias=zeros; use random values so the
    # affine path is actually exercised (semantics are identical).
    weight = 1.0 + 0.1 * jax.random.normal(kw, (C,), jnp.float32)
    bias = 0.1 * jax.random.normal(kb, (C,), jnp.float32)

    y = layer_norm_2d(x, weight, bias, eps=eps)
    jax.block_until_ready(y)
    np.testing.assert_allclose(
        np.asarray(y), np.asarray(layer_norm_2d_ref(x, weight, bias, eps=eps)),
        rtol=2e-5, atol=2e-5)
    assert y.shape == (B, C, H, W)

    # Case 2: HW not a multiple of 128 (14x14 -> wrapper pads to 256 lanes).
    x2 = jax.random.normal(kx2, (B, C, 14, 14), jnp.float32)
    y2 = layer_norm_2d(x2, weight, bias, eps=eps)
    jax.block_until_ready(y2)
    np.testing.assert_allclose(
        np.asarray(y2), np.asarray(layer_norm_2d_ref(x2, weight, bias, eps=eps)),
        rtol=2e-5, atol=2e-5)
    assert y2.shape == (B, C, 14, 14)

    print("KERNEL_OK")
</pallas_src>

<mosaic_0001>
module attributes {stable_mosaic.version = 11 : i64} {
  func.func @_layernorm2d_kernel(%arg0: i32, %arg1: i32, %arg2: memref<1x4x256xf32, #tpu.memory_space<vmem>>, %arg3: memref<4x2xf32, #tpu.memory_space<vmem>>, %arg4: memref<1x4x256xf32, #tpu.memory_space<vmem>>) attributes {dimension_semantics = [#tpu.dimension_semantics<parallel>, #tpu.dimension_semantics<parallel>], iteration_bounds = array<i64: 2, 1>, scalar_prefetch = 0 : i64, scratch_operands = 0 : i64, tpu.core_type = #tpu.core_type<tc>, window_params = [{transform_indices = @transform_0, window_bounds = array<i64: 1, 4, 256>}, {pipeline_mode = #tpu.pipeline_mode<synchronous>, transform_indices = @transform_1, window_bounds = array<i64: 4, 2>}, {transform_indices = @transform_2, window_bounds = array<i64: 1, 4, 256>}]} {
    %c0 = arith.constant 0 : index
    %c0_0 = arith.constant 0 : index
    %c0_1 = arith.constant 0 : index
    %0 = vector.load %arg2[%c0, %c0_0, %c0_1] : memref<1x4x256xf32, #tpu.memory_space<vmem>>, vector<1x4x256xf32>
    %1 = vector.shape_cast %0 : vector<1x4x256xf32> to vector<4x256xf32>
    %cst = arith.constant dense<0.000000e+00> : vector<256xf32>
    %2 = vector.multi_reduction <add>, %1, %cst [0] : vector<4x256xf32> to vector<256xf32>
    %3 = vector.shape_cast %2 : vector<256xf32> to vector<1x256xf32>
    %cst_2 = arith.constant 4.000000e+00 : f32
    %4 = vector.broadcast %cst_2 : f32 to vector<1x256xf32>
    %5 = arith.divf %3, %4 : vector<1x256xf32>
    %6 = vector.broadcast %5 : vector<1x256xf32> to vector<4x256xf32>
    %7 = arith.subf %1, %6 : vector<4x256xf32>
    %8 = arith.mulf %7, %7 : vector<4x256xf32>
    %cst_3 = arith.constant dense<0.000000e+00> : vector<256xf32>
    %9 = vector.multi_reduction <add>, %8, %cst_3 [0] : vector<4x256xf32> to vector<256xf32>
    %10 = vector.shape_cast %9 : vector<256xf32> to vector<1x256xf32>
    %cst_4 = arith.constant 4.000000e+00 : f32
    %11 = vector.broadcast %cst_4 : f32 to vector<1x256xf32>
    %12 = arith.divf %10, %11 : vector<1x256xf32>
    %cst_5 = arith.constant 9.99999997E-7 : f32
    %13 = vector.broadcast %cst_5 : f32 to vector<1x256xf32>
    %14 = arith.addf %12, %13 : vector<1x256xf32>
    %15 = math.rsqrt %14 : vector<1x256xf32>
    %c0_6 = arith.constant 0 : index
    %c0_7 = arith.constant 0 : index
    %16 = vector.load %arg3[%c0_6, %c0_7] : memref<4x2xf32, #tpu.memory_space<vmem>>, vector<4x2xf32>
    %17 = vector.extract_strided_slice %16 {offsets = [0, 0], sizes = [4, 1], strides = [1, 1]} : vector<4x2xf32> to vector<4x1xf32>
    %18 = vector.extract_strided_slice %16 {offsets = [0, 1], sizes = [4, 1], strides = [1, 1]} : vector<4x2xf32> to vector<4x1xf32>
    %19 = vector.broadcast %15 : vector<1x256xf32> to vector<4x256xf32>
    %20 = arith.mulf %7, %19 : vector<4x256xf32>
    %21 = vector.broadcast %17 : vector<4x1xf32> to vector<4x256xf32>
    %22 = arith.mulf %20, %21 : vector<4x256xf32>
    %23 = vector.broadcast %18 : vector<4x1xf32> to vector<4x256xf32>
    %24 = arith.addf %22, %23 : vector<4x256xf32>
    %c0_8 = arith.constant 0 : index
    %c0_9 = arith.constant 0 : index
    %c0_10 = arith.constant 0 : index
    %25 = vector.load %arg4[%c0_8, %c0_9, %c0_10] : memref<1x4x256xf32, #tpu.memory_space<vmem>>, vector<1x4x256xf32>
    %26 = vector.shape_cast %25 : vector<1x4x256xf32> to vector<4x256xf32>
    %27 = vector.shape_cast %24 : vector<4x256xf32> to vector<1x4x256xf32>
    tpu.vector_store %arg4[%c0_8, %c0_9, %c0_10], %27 {strides = array<i32>} : memref<1x4x256xf32, #tpu.memory_space<vmem>>, vector<1x4x256xf32>,
    return
  }
  func.func @transform_0(%arg0: i32, %arg1: i32) -> (i32, i32, i32) {
    %c0_i32 = arith.constant 0 : i32
    %c0_i32_0 = arith.constant 0 : i32
    return %arg0, %c0_i32, %arg1 : i32, i32, i32
  }
  func.func @transform_1(%arg0: i32, %arg1: i32) -> (i32, i32) {
    %c0_i32 = arith.constant 0 : i32
    %c0_i32_0 = arith.constant 0 : i32
    %c0_i32_1 = arith.constant 0 : i32
    return %c0_i32, %c0_i32_0 : i32, i32
  }
  func.func @transform_2(%arg0: i32, %arg1: i32) -> (i32, i32, i32) {
    %c0_i32 = arith.constant 0 : i32
    %c0_i32_0 = arith.constant 0 : i32
    return %arg0, %c0_i32, %arg1 : i32, i32, i32
  }
}

</mosaic_0001>

<llo_original>
// kernel: tpu_custom_call.1
$region0: #{tpu_custom_call.1}
  #allocation0 [shape = 'u32[]', space=smem, size = 0x4, offset = 0x4, fixed_abs, tag = 'smem constant byte address 0x4 - core index']
  #allocation1 [shape = 'u32[72,128]{1,0:T(1,128)}', space=vmem, size = 0x9000, scoped, tag = 'internal scratch']
  %s0 = inlined_call_operand.hbm [shape: f32[2,4,256], index: 0, kind: input, shape index: {}]
  %s1 = inlined_call_operand.vmem [shape: f32[4,2], index: 1, kind: input, shape index: {}]
  %s2 = inlined_call_operand.hbm [shape: f32[2,4,256], index: 2, kind: output, shape index: {}]
  %s3 = sld [smem:[#allocation0]]
  $region45: #{tpu_custom_call.1} parent=0
    _
  %s5 = ssub.s32 1, %s3
  %s6 = scalar_select 0, %s5, %s3
  $region1: #{tpu_custom_call.1} parent=0
    #allocation2 [shape = 'u8[8192]{0}', space=vmem, size = 0x2000, scoped, tag = 'input window, operand 0']
    #allocation3 [shape = 's32[2]{0}', space=sflag, size = 0x8, scoped, tag = 'scoped memory for tpu_custom_call.1']
    #allocation4 [shape = 's32[2]{0}', space=sflag, size = 0x8, scoped, tag = 'scoped memory for tpu_custom_call.1']
    #allocation5 [shape = 'u8[8192]{0}', space=vmem, size = 0x2000, scoped, tag = 'output window, operand 0']
    %7 = vsyncpa [#allocation3], 0
    %s8 = scalar_lea.sflag [#allocation3], 1
    %9 = vsyncpa %s8, 0
    %10 = vsyncpa [#allocation4], 0
    %s11 = scalar_lea.sflag [#allocation4], 1
    %12 = vsyncpa %s11, 0
    loop: start=0, step=1, limit=4
    $region2: #{tpu_custom_call.1} parent=1 // loop_pre_header
      _
    $region3: #{tpu_custom_call.1} parent=1 // loop_header
      %s14 = sphi 0, %s18
      %p15 = scmp.ge.s32.totalorder %s14, 4
      %s21 = sphi 0, %s33
      %s22 = sphi 0, %s29
      %s23 = sphi 0, %s21
      %s24 = sphi 0, %s22
      %s25 = sphi 0, %s23
      %s26 = sphi 0, %s24
      %s38 = sphi 0, %s40
      %s41 = sphi 0, %s38
      %s42 = sphi 0, %s41
      %s58 = sphi 0, %s42
      %s62 = sphi 0, %s62
      %s64 = sphi 0, %s62
      %s65 = sphi 0, %s64
      %s79 = sphi 0, %s65
      %s87 = sphi 0, %s89
      %s90 = sphi 0, %s87
      %s91 = sphi 0, %s90
      %s107 = sphi 0, %s91
    $region4: #{tpu_custom_call.1} parent=1 // loop_header_branch
      %17 = sbr.rel (%p15) target = $region8
    $region5: #{tpu_custom_call.1} parent=1 // loop_body
      %s19 = ssub.s32 %s14, 1
      %s20 = ssub.s32 %s14, 2
      %s27 = sadd.s32 1, %s22
      %p28 = scmp.ge.s32.totalorder %s27, 1
      %s29 = scalar_select %p28, 0, %s27
      %s30 = sadd.s32 1, %s21
      %s31 = scalar_select %p28, %s30, %s21
      %p32 = scmp.ge.s32.totalorder %s31, 2
      %s33 = scalar_select %p32, 0, %s31
      %s34 = ssub.s32 %s21, %s33
      %s35 = ssub.s32 %s22, %s29
      %s36 = sor.u32 %s34, %s35
      %p37 = scmp.eq.s32.totalorder %s36, 0
      %s39 = sadd.s32 %s38, 1
      %s40 = scalar_select %p37, %s38, %s39
      %p43 = pneg %p37
      %p44 = scmp.eq.s32.totalorder %s14, 1
      %p45 = por %p43, %p44
      %p46 = scmp.ne.s32.totalorder %s38, %s41
      %p47 = scmp.eq.s32.totalorder %s14, 0
      %p48 = por %p46, %p47
      %p49 = scmp.ne.s32.totalorder %s38, %s41
      %p50 = scmp.eq.s32.totalorder %s19, 1
      %p51 = por %p49, %p50
      %p52 = scmp.ne.s32.totalorder %s41, %s42
      %p53 = scmp.eq.s32.totalorder %s19, 0
      %p54 = por %p52, %p53
      %p55 = scmp.ne.s32.totalorder %s41, %s42
      %p56 = scmp.eq.s32.totalorder %s20, 1
      %p57 = por %p55, %p56
      %p59 = scmp.ne.s32.totalorder %s42, %s58
      %p60 = scmp.eq.s32.totalorder %s20, 0
      %p61 = por %p59, %p60
      %s63 = sadd.s32 %s62, 1
      %p66 = scmp.eq.s32.totalorder %s14, 1
      %p67 = scmp.ne.s32.totalorder %s62, %s64
      %p68 = scmp.eq.s32.totalorder %s14, 0
      %p69 = por %p67, %p68
      %p70 = scmp.ne.s32.totalorder %s62, %s64
      %p71 = scmp.eq.s32.totalorder %s19, 1
      %p72 = por %p70, %p71
      %p73 = scmp.ne.s32.totalorder %s64, %s65
      %p74 = scmp.eq.s32.totalorder %s19, 0
      %p75 = por %p73, %p74
      %p76 = scmp.ne.s32.totalorder %s64, %s65
      %p77 = scmp.eq.s32.totalorder %s20, 1
      %p78 = por %p76, %p77
      %p80 = scmp.ne.s32.totalorder %s65, %s79
      %p81 = scmp.eq.s32.totalorder %s20, 0
      %p82 = por %p80, %p81
      %s83 = ssub.s32 %s21, %s33
      %s84 = ssub.s32 %s22, %s29
      %s85 = sor.u32 %s83, %s84
      %p86 = scmp.eq.s32.totalorder %s85, 0
      %s88 = sadd.s32 %s87, 1
      %s89 = scalar_select %p86, %s87, %s88
      %p92 = pneg %p86
      %p93 = scmp.eq.s32.totalorder %s14, 1
      %p94 = por %p92, %p93
      %p95 = scmp.ne.s32.totalorder %s87, %s90
      %p96 = scmp.eq.s32.totalorder %s14, 0
      %p97 = por %p95, %p96
      %p98 = scmp.ne.s32.totalorder %s87, %s90
      %p99 = scmp.eq.s32.totalorder %s19, 1
      %p100 = por %p98, %p99
      %p101 = scmp.ne.s32.totalorder %s90, %s91
      %p102 = scmp.eq.s32.totalorder %s19, 0
      %p103 = por %p101, %p102
      %p104 = scmp.ne.s32.totalorder %s90, %s91
      %p105 = scmp.eq.s32.totalorder %s20, 1
      %p106 = por %p104, %p105
      %p108 = scmp.ne.s32.totalorder %s91, %s107
      %p109 = scmp.eq.s32.totalorder %s20, 0
      %p110 = por %p108, %p109
      %p111 = scmp.le.s32.totalorder 1, %s14
      %p112 = scmp.lt.s32.totalorder %s14, 3
      %p113 = pnand %p111, %p112
      %p114 = pneg %p113
      // Predicated region
      $region9: #{tpu_custom_call.1} parent=5 // pred_check
        _
      $region10: #{tpu_custom_call.1} parent=5 // pred_check_branch
        %116 = sbr.rel (%p113) target = $region12
      $region11: #{tpu_custom_call.1} parent=5 // pred_region
        %s117 = ssub.s32 %s14, 1
        // Predicated region
        $region13: #{tpu_custom_call.1} parent=11 // pred_check
          %p118 = pneg %p75
        $region14: #{tpu_custom_call.1} parent=11 // pred_check_branch
          %120 = sbr.rel (%p118) target = $region16
        $region15: #{tpu_custom_call.1} parent=11 // pred_region
          _
        $region16: #{tpu_custom_call.1} parent=11 // pred_fallthru
          _
      $region12: #{tpu_custom_call.1} parent=5 // pred_fallthru
        _
      %p121 = scmp.lt.s32.totalorder %s14, 2
      // Predicated region
      $region17: #{tpu_custom_call.1} parent=5 // pred_check
        %p122 = pneg %p121
      $region18: #{tpu_custom_call.1} parent=5 // pred_check_branch
        %124 = sbr.rel (%p122) target = $region20
      $region19: #{tpu_custom_call.1} parent=5 // pred_region
        // Predicated region
        $region21: #{tpu_custom_call.1} parent=19 // pred_check
          %p125 = pneg %p48
        $region22: #{tpu_custom_call.1} parent=19 // pred_check_branch
          %127 = sbr.rel (%p125) target = $region24
        $region23: #{tpu_custom_call.1} parent=19 // pred_region
          %s128 = sand.u32 %s38, 1
          %s129 = scalar_lea.sflag [#allocation3], %s128
          %s130 = sand.u32 %s38, 1
          %s131 = smul.addr %s130, 8
          %s132 = scalar_lea.vmem [#allocation2], %s131
          %s133 = smul.u32 2, %s22
          %135 = vsyncadd %s129, 0
          %s136 = smul.addr %s21, 2
          %s137 = sadd.s32 %s133, %s136
          %s138 = smul.addr %s137, 4
          %s139 = scalar_lea.hbm %s0, %s138
          %s141 = sshll.u32 %s139, 4
          %s142 = int_to_ptr.hbm [resolvable:$true] %s141
          %s143 = sshll.u32 %s132, 4
          %s144 = int_to_ptr.vmem [resolvable:$true] %s143
          %146 = dma.hbm_to_vmem [thread:$0]  %s142, 128, %s144, %s129
        $region24: #{tpu_custom_call.1} parent=19 // pred_fallthru
          _
      $region20: #{tpu_custom_call.1} parent=5 // pred_fallthru
        _
      %p147 = scmp.le.s32.totalorder 1, %s14
      %p148 = scmp.lt.s32.totalorder %s14, 3
      %p149 = pnand %p147, %p148
      %p150 = pneg %p149
      // Predicated region
      $region25: #{tpu_custom_call.1} parent=5 // pred_check
        _
      $region26: #{tpu_custom_call.1} parent=5 // pred_check_branch
        %152 = sbr.rel (%p149) target = $region28
      $region27: #{tpu_custom_call.1} parent=5 // pred_region
        %s153 = ssub.s32 %s14, 1
        %s154 = sand.u32 %s41, 1
        %s155 = scalar_lea.sflag [#allocation3], %s154
        %s156 = sand.u32 %s41, 1
        %s157 = smul.addr %s156, 8
        %s158 = scalar_lea.vmem [#allocation2], %s157
        // Predicated region
        $region29: #{tpu_custom_call.1} parent=27 // pred_check
          %p159 = pneg %p54
        $region30: #{tpu_custom_call.1} parent=27 // pred_check_branch
          %161 = sbr.rel (%p159) target = $region32
        $region31: #{tpu_custom_call.1} parent=27 // pred_region
          %163 = dma.done %s155, 128
        $region32: #{tpu_custom_call.1} parent=27 // pred_fallthru
          _
        %s164 = sand.u32 %s41, 1
        %s165 = scalar_lea.sflag [#allocation3], %s164
        %s166 = sand.u32 %s41, 1
        %s167 = smul.addr %s166, 8
        %s168 = scalar_lea.vmem [#allocation2], %s167
        %p169 = pneg %p54
        %p170 = pneg %p51
        %p171 = pneg %p75
        %p172 = pneg %p72
        %p173 = pneg %p103
        %p174 = pneg %p100
        %s175 = sand.u32 %s90, 1
        %s176 = scalar_lea.sflag [#allocation4], %s175
        %s177 = sand.u32 %s90, 1
        %s178 = smul.addr %s177, 8
        %s179 = scalar_lea.vmem [#allocation5], %s178
        %s180 = smul.u32 2, %s24
        %s181 = smul.u32 2, %s24
        %v182 = vld [vmem:[%s158] sm:$0xff]
        %184 = vst [vmem:[#allocation1] ss:$2 sm:$0xff] %v182
        %v185 = vld.sshfl [vmem:[#allocation1] sm:$0xff pattern:$0x75316420]
        %v186 = vld.sshfl [vmem:[#allocation1 + $0x8] sm:$0xff pattern:$0x75316420]
        %vm189 = vcmask 1043456
        %v190 = vsel %vm189, %v185, 0.0
        %v191 = vrot.slane %v190, 4
        %v192 = vadd.f32 %v190, %v191
        %v193 = vrot.slane %v192, 2
        %v194 = vadd.f32 %v192, %v193
        %v195 = vrot.slane %v194, 1
        %v196 = vadd.f32 %v194, %v195
        %v197 = vsel %vm189, %v186, 0.0
        %v198 = vrot.slane %v197, 4
        %v199 = vadd.f32 %v197, %v198
        %v200 = vrot.slane %v199, 2
        %v201 = vadd.f32 %v199, %v200
        %v202 = vrot.slane %v201, 1
        %v203 = vadd.f32 %v201, %v202
        %v204 = vrcp.pop 4.0
        %v205 = vmul.f32 4.0, %v204
        %v206 = vsub.f32 1.0, %v205
        %v207 = vmul.f32 %v204, %v206
        %v208 = vadd.f32 %v204, %v207
        %vm209 = vweird.f32 %v204
        %v210 = vsel %vm209, %v204, %v208
        %v211 = vmul.f32 %v196, %v210
        %v212 = vmul.f32 %v203, %v210
        %v215 = vrot.slane %v212, 4
        %v216 = vsel %vm189, %v211, %v215
        %v218 = vsub.f32 %v182, %v216
        %v219 = vmul.f32 %v218, %v218
        %221 = vst [vmem:[#allocation1] ss:$2 sm:$0xff] %v219
        %v222 = vld.sshfl [vmem:[#allocation1] sm:$0xff pattern:$0x75316420]
        %v223 = vld.sshfl [vmem:[#allocation1 + $0x8] sm:$0xff pattern:$0x75316420]
        %v226 = vsel %vm189, %v222, 0.0
        %v227 = vrot.slane %v226, 4
        %v228 = vadd.f32 %v226, %v227
        %v229 = vrot.slane %v228, 2
        %v230 = vadd.f32 %v228, %v229
        %v231 = vrot.slane %v230, 1
        %v232 = vadd.f32 %v230, %v231
        %v233 = vsel %vm189, %v223, 0.0
        %v234 = vrot.slane %v233, 4
        %v235 = vadd.f32 %v233, %v234
        %v236 = vrot.slane %v235, 2
        %v237 = vadd.f32 %v235, %v236
        %v238 = vrot.slane %v237, 1
        %v239 = vadd.f32 %v237, %v238
        %v240 = vmul.f32 %v232, %v210
        %v241 = vmul.f32 %v239, %v210
        %v242 = vadd.f32 %v240, 1e-06
        %v243 = vadd.f32 %v241, 1e-06
        %v244 = vrsqrt.pop %v242
        %v245 = vmul.f32 %v244, %v242
        %v246 = vmul.f32 %v245, %v244
        %v247 = vmul.f32 0.5, %v246
        %v248 = vsub.f32 1.5, %v247
        %v249 = vmul.f32 %v244, %v248
        %vm250 = vweird.f32 %v242
        %vm251 = vweird.f32 %v244
        %vm252 = vmor %vm250, %vm251
        %v253 = vsel %vm252, %v244, %v249
        %v254 = vrsqrt.pop %v243
        %v255 = vmul.f32 %v254, %v243
        %v256 = vmul.f32 %v255, %v254
        %v257 = vmul.f32 0.5, %v256
        %v258 = vsub.f32 1.5, %v257
        %v259 = vmul.f32 %v254, %v258
        %vm260 = vweird.f32 %v243
        %vm261 = vweird.f32 %v254
        %vm262 = vmor %vm260, %vm261
        %v263 = vsel %vm262, %v254, %v259
        %v264 = vld [vmem:[%s1] sm:$0xf]
        %v267 = vrot.slane %v263, 4
        %v268 = vsel %vm189, %v253, %v267
        %v270 = vmul.f32 %v218, %v268
        %272 = vset.pattern.permute.xlu0 0
        %273 = vperm.xlu0 %272, %v264
        %v274 = vpop.permute.xlu0 %273
        %v276 = vunpack.c.l.s4 839922192
        %v277 = vunpack.c.0.s8 %v276
        %v278 = vperm.slane %v274, %v277
        %v280 = vmul.f32 %v270, %v278
        %281 = vset.pattern.permute.xlu0 1
        %282 = vperm.xlu0 %281, %v264
        %v283 = vpop.permute.xlu0 %282
        %v285 = vunpack.c.l.s4 839922192
        %v286 = vunpack.c.0.s8 %v285
        %v287 = vperm.slane %v283, %v286
        %v289 = vadd.f32 %v280, %v287
        %290 = vst [vmem:[%s179] sm:$0xff] %v289
        %s291 = sand.u32 %s90, 1
        %s292 = scalar_lea.sflag [#allocation4], %s291
        %s293 = sand.u32 %s90, 1
        %s294 = smul.addr %s293, 8
        %s295 = scalar_lea.vmem [#allocation5], %s294
        // Predicated region
        $region33: #{tpu_custom_call.1} parent=27 // pred_check
          %p296 = pneg %p100
        $region34: #{tpu_custom_call.1} parent=27 // pred_check_branch
          %298 = sbr.rel (%p296) target = $region36
        $region35: #{tpu_custom_call.1} parent=27 // pred_region
          %s299 = smul.u32 2, %s24
          %301 = vsyncadd %s292, 0
          %s302 = smul.addr %s23, 2
          %s303 = sadd.s32 %s299, %s302
          %s304 = smul.addr %s303, 4
          %s305 = scalar_lea.hbm %s2, %s304
          %s307 = sshll.u32 %s295, 4
          %s308 = int_to_ptr.vmem [resolvable:$true] %s307
          %s309 = sshll.u32 %s305, 4
          %s310 = int_to_ptr.hbm [resolvable:$true] %s309
          %312 = dma.vmem_to_hbm [thread:$0]  %s308, 128, %s310, %s292
        $region36: #{tpu_custom_call.1} parent=27 // pred_fallthru
          _
      $region28: #{tpu_custom_call.1} parent=5 // pred_fallthru
        _
      %p313 = scmp.le.s32.totalorder 2, %s14
      // Predicated region
      $region37: #{tpu_custom_call.1} parent=5 // pred_check
        %p314 = pneg %p313
      $region38: #{tpu_custom_call.1} parent=5 // pred_check_branch
        %316 = sbr.rel (%p314) target = $region40
      $region39: #{tpu_custom_call.1} parent=5 // pred_region
        %s317 = ssub.s32 %s14, 2
        // Predicated region
        $region41: #{tpu_custom_call.1} parent=39 // pred_check
          %p318 = pneg %p106
        $region42: #{tpu_custom_call.1} parent=39 // pred_check_branch
          %320 = sbr.rel (%p318) target = $region44
        $region43: #{tpu_custom_call.1} parent=39 // pred_region
          %s321 = sand.u32 %s91, 1
          %s322 = scalar_lea.sflag [#allocation4], %s321
          %s323 = sand.u32 %s91, 1
          %s324 = smul.addr %s323, 8
          %s325 = scalar_lea.vmem [#allocation5], %s324
          %327 = dma.done %s322, 128
        $region44: #{tpu_custom_call.1} parent=39 // pred_fallthru
          _
      $region40: #{tpu_custom_call.1} parent=5 // pred_fallthru
        _
    $region6: #{tpu_custom_call.1} parent=1 // loop_footer
      %s18 = sadd.s32 1, %s14
    $region7: #{tpu_custom_call.1} parent=1 // loop_footer_branch
      %13 = sbr.rel target = $region3
    $region8: #{tpu_custom_call.1} parent=1 // loop_exit
      _
    %328 = vsyncpa [#allocation3], 1
    %s329 = scalar_lea.sflag [#allocation3], 1
    %330 = vsyncpa %s329, 1
    %331 = vsyncpa [#allocation4], 1
    %s332 = scalar_lea.sflag [#allocation4], 1
    %333 = vsyncpa %s332, 1

</llo_original>
